<compile_context>
chip_gen: v5e
topology: v5e:2x2
jax: 0.10.0
libtpu: 0.0.40
codegen_flags: <defaults>
</compile_context>

<pallas_src>
import functools

import jax
import jax.numpy as jnp
from jax.experimental import pallas as pl
from jax.experimental.pallas import tpu as pltpu


def _round_up(x: int, m: int) -> int:
    return (x + m - 1) // m * m


def _rnn_kernel(x_ref, wih_ref, bias_ref, whh_ref, fcw_ref, fcb_ref,
                out_ref, h_ref, *, t_chunk, seq_len, needs_time_mask, unroll):
    """Grid = (batch_tiles, time_chunks).

    x_ref   : (Tc, Btile, Ep) bf16   embedded inputs for this chunk
    wih_ref : (Ep, Hp)        bf16   W_ih^T (zero padded)
    bias_ref: (1, Hp)         f32    b_ih + b_hh (zero padded)
    whh_ref : (Hp, Hp)        bf16   W_hh^T (zero padded)
    fcw_ref : (Hp, Cp)        bf16   fc weight^T (zero padded)
    fcb_ref : (1, Cp)         f32    fc bias (zero padded)
    out_ref : (Btile, Cp)     f32    logits (lane-dense; sliced in wrapper)
    h_ref   : (Btile, Hp)     f32    hidden-state carry (VMEM scratch)
    """
    t_idx = pl.program_id(1)

    @pl.when(t_idx == 0)
    def _():
        h_ref[...] = jnp.zeros_like(h_ref)

    def step(i, h):
        # Recurrence-independent input projection, fused into the kernel.
        # With the loop (partially) unrolled the scheduler overlaps step i+1's
        # projection matmul with step i's tanh (EUP slot).
        xp_t = (jnp.dot(x_ref[i], wih_ref[...],
                        preferred_element_type=jnp.float32)
                + bias_ref[...])
        # Serial critical path: one (Btile,Hp)x(Hp,Hp) bf16 MXU op + f32 tanh.
        h_new = jnp.tanh(
            xp_t + jnp.dot(h.astype(jnp.bfloat16), whh_ref[...],
                           preferred_element_type=jnp.float32))
        if needs_time_mask:
            # Padded time steps (only in the last chunk) must leave h alone.
            keep = ((t_idx * t_chunk + i) < seq_len).astype(jnp.float32)
            h_new = h + keep * (h_new - h)
        return h_new

    h = jax.lax.fori_loop(0, t_chunk, step, h_ref[...], unroll=unroll)
    h_ref[...] = h

    @pl.when(t_idx == pl.num_programs(1) - 1)
    def _():
        out_ref[...] = (
            jnp.dot(h.astype(jnp.bfloat16), fcw_ref[...],
                    preferred_element_type=jnp.float32)
            + fcb_ref[...]).astype(out_ref.dtype)


def rnn_forward(x_idx, embed_table, w_ih, w_hh, b_ih, b_hh, fc_w, fc_b):
    """x_idx: int32 (B, T) token indices.  Returns (B, class_num) logits."""
    B, T = x_idx.shape
    E = embed_table.shape[1]
    H = w_ih.shape[0]
    C = fc_w.shape[0]

    Ep = _round_up(E, 128)    # lane alignment for embedded inputs
    Hp = _round_up(H, 128)    # lane alignment for hidden state
    Cp = _round_up(C, 128)    # lane-dense kernel output (no masked stores)

    # --- batch tiling (v7x megacore) ---------------------------------------
    # Split batch across TensorCores only when each tile still feeds the MXU
    # with >=128 rows: the per-step matmul is latency bound, so extra rows are
    # nearly free and splitting a small batch would just halve MXU row fill.
    Bp = _round_up(B, 8)
    n_btiles = 2 if Bp >= 256 else 1
    Bp = _round_up(B, 8 * n_btiles)
    b_tile = Bp // n_btiles

    # --- time chunking -------------------------------------------------------
    # Keep each double-buffered bf16 input chunk <= ~2 MiB so peak VMEM stays
    # far below the limit on every chip (v7x: 64 MiB physical / 32 MiB scoped).
    bytes_per_step = b_tile * Ep * 2                      # bf16
    t_chunk = max(1, min(T, (2 * 1024 * 1024) // bytes_per_step))
    t_chunk = min(t_chunk, 64)                            # bound code size
    n_tchunks = -(-T // t_chunk)
    Tp = n_tchunks * t_chunk
    needs_time_mask = (Tp != T)
    unroll = min(t_chunk, 8)   # partial unroll: ILP without IMEM blowup

    # --- XLA glue: embedding gather only (projection is fused in-kernel) ----
    # Gather directly in (T, B) order: transpose the tiny index array instead
    # of materializing a transposed copy of the embedded tensor.
    # TODO(synk): the gather itself could also be fused into the kernel via
    # scalar-prefetched indices + one-hot matmul / DMA gather; kept in XLA.
    x_tbe = jnp.take(embed_table, x_idx.T, axis=0)        # (T, B, E) f32
    x_p = jnp.pad(x_tbe.astype(jnp.bfloat16),
                  ((0, Tp - T), (0, Bp - B), (0, Ep - E)))  # (Tp, Bp, Ep) bf16

    # Weights as bf16 MXU operands; biases stay f32 (added post-accumulate).
    wih_t = jnp.pad(w_ih.T, ((0, Ep - E), (0, Hp - H))).astype(jnp.bfloat16)
    bias = jnp.pad((b_ih + b_hh).astype(jnp.float32).reshape(1, H),
                   ((0, 0), (0, Hp - H)))
    whh_t = jnp.pad(w_hh.T, ((0, Hp - H), (0, Hp - H))).astype(jnp.bfloat16)
    fcw_t = jnp.pad(fc_w.T, ((0, Hp - H), (0, Cp - C))).astype(jnp.bfloat16)
    fcb = jnp.pad(fc_b.reshape(1, C).astype(jnp.float32),
                  ((0, 0), (0, Cp - C)))

    kernel = functools.partial(
        _rnn_kernel, t_chunk=t_chunk, seq_len=T,
        needs_time_mask=needs_time_mask, unroll=unroll)

    out_p = pl.pallas_call(
        kernel,
        out_shape=jax.ShapeDtypeStruct((Bp, Cp), jnp.float32),
        grid_spec=pltpu.PrefetchScalarGridSpec(
            num_scalar_prefetch=0,
            grid=(n_btiles, n_tchunks),
            in_specs=[
                # streamed input chunks (double-buffered by the pipeline)
                pl.BlockSpec((t_chunk, b_tile, Ep), lambda b, t: (t, b, 0)),
                # resident weights / biases (constant index maps -> DMA'd once)
                pl.BlockSpec((Ep, Hp), lambda b, t: (0, 0)),
                pl.BlockSpec((1, Hp), lambda b, t: (0, 0)),
                pl.BlockSpec((Hp, Hp), lambda b, t: (0, 0)),
                pl.BlockSpec((Hp, Cp), lambda b, t: (0, 0)),
                pl.BlockSpec((1, Cp), lambda b, t: (0, 0)),
            ],
            out_specs=pl.BlockSpec((b_tile, Cp), lambda b, t: (b, 0)),
            scratch_shapes=[pltpu.VMEM((b_tile, Hp), jnp.float32)],  # h carry
        ),
        compiler_params=pltpu.CompilerParams(
            dimension_semantics=("parallel", "arbitrary"),
            # Explicit scoped-VMEM limit (safe on v5e/v6e/v7x); the chunked
            # layout keeps the real footprint far below this.
            vmem_limit_bytes=32 * 1024 * 1024,
        ),
    )(x_p, wih_t, bias, whh_t, fcw_t, fcb)

    return out_p[:B, :C]


def rnn_reference(x_idx, embed_table, w_ih, w_hh, b_ih, b_hh, fc_w, fc_b):
    """Pure-JAX reference matching torch.nn.RNN(batch_first=True) semantics."""
    embed_x = jnp.take(embed_table, x_idx, axis=0)            # (B, T, E)
    B = x_idx.shape[0]
    H = w_ih.shape[0]

    def step(h, x_t):
        h_new = jnp.tanh(x_t @ w_ih.T + b_ih + h @ w_hh.T + b_hh)
        return h_new, None

    h0 = jnp.zeros((B, H), jnp.float32)
    h_final, _ = jax.lax.scan(step, h0, jnp.transpose(embed_x, (1, 0, 2)))
    return h_final @ fc_w.T + fc_b


def _run_case(key, *, vocab_size, E, H, C, B, T, name):
    keys = jax.random.split(key, 8)
    embed_table = jax.random.normal(keys[0], (vocab_size, E), jnp.float32) * 0.1
    w_ih = jax.random.normal(keys[1], (H, E), jnp.float32) * 0.1
    w_hh = jax.random.normal(keys[2], (H, H), jnp.float32) * 0.1
    b_ih = jax.random.normal(keys[3], (H,), jnp.float32) * 0.1
    b_hh = jax.random.normal(keys[4], (H,), jnp.float32) * 0.1
    fc_w = jax.random.normal(keys[5], (C, H), jnp.float32) * 0.1
    fc_b = jax.random.normal(keys[6], (C,), jnp.float32) * 0.1
    x_idx = jax.random.randint(keys[7], (B, T), 0, vocab_size, dtype=jnp.int32)

    out = jax.jit(rnn_forward)(x_idx, embed_table, w_ih, w_hh,
                               b_ih, b_hh, fc_w, fc_b)
    out = jax.block_until_ready(out)

    ref = rnn_reference(x_idx, embed_table, w_ih, w_hh, b_ih, b_hh, fc_w, fc_b)
    assert out.shape == (B, C), (name, out.shape)
    # bf16 MXU operands -> loosened tolerance vs the f32 reference.
    assert jnp.allclose(out, ref, atol=2e-2, rtol=2e-2), (name, out, ref)


if __name__ == "__main__":
    key = jax.random.PRNGKey(0)
    k1, k2 = jax.random.split(key)

    # Primary small-shape case matching the module's intended use.
    _run_case(k1, vocab_size=50, E=32, H=32, C=2, B=2, T=8, name="small")
    # Also exercise multi-chunk time pipelining, ragged T (masking path) and
    # non-aligned E/H/C padding.
    _run_case(k2, vocab_size=97, E=20, H=24, C=5, B=3, T=70, name="chunked")

    print("KERNEL_OK")
</pallas_src>

<mosaic_0001>
module attributes {stable_mosaic.version = 11 : i64} {
  func.func @_rnn_kernel(%arg0: i32, %arg1: i32, %arg2: memref<8x8x128xbf16, #tpu.memory_space<vmem>>, %arg3: memref<128x128xbf16, #tpu.memory_space<vmem>>, %arg4: memref<1x128xf32, #tpu.memory_space<vmem>>, %arg5: memref<128x128xbf16, #tpu.memory_space<vmem>>, %arg6: memref<128x128xbf16, #tpu.memory_space<vmem>>, %arg7: memref<1x128xf32, #tpu.memory_space<vmem>>, %arg8: memref<8x128xf32, #tpu.memory_space<vmem>>, %arg9: memref<8x128xf32, #tpu.memory_space<vmem>>) attributes {dimension_semantics = [#tpu.dimension_semantics<parallel>, #tpu.dimension_semantics<arbitrary>], iteration_bounds = array<i64: 1, 1>, scalar_prefetch = 0 : i64, scratch_operands = 1 : i64, tpu.core_type = #tpu.core_type<tc>, window_params = [{transform_indices = @transform_0, window_bounds = array<i64: 8, 8, 128>}, {pipeline_mode = #tpu.pipeline_mode<synchronous>, transform_indices = @transform_1, window_bounds = array<i64: 128, 128>}, {pipeline_mode = #tpu.pipeline_mode<synchronous>, transform_indices = @transform_2, window_bounds = array<i64: 1, 128>}, {pipeline_mode = #tpu.pipeline_mode<synchronous>, transform_indices = @transform_3, window_bounds = array<i64: 128, 128>}, {pipeline_mode = #tpu.pipeline_mode<synchronous>, transform_indices = @transform_4, window_bounds = array<i64: 128, 128>}, {pipeline_mode = #tpu.pipeline_mode<synchronous>, transform_indices = @transform_5, window_bounds = array<i64: 1, 128>}, {transform_indices = @transform_6, window_bounds = array<i64: 8, 128>}]} {
    %c0_i32 = arith.constant 0 : i32
    %0 = arith.cmpi eq, %arg1, %c0_i32 : i32
    %1 = arith.extui %0 : i1 to i32
    %c0_i32_0 = arith.constant 0 : i32
    %2 = arith.cmpi ne, %1, %c0_i32_0 : i32
    scf.if %2 {
      %cst_86 = arith.constant 0.000000e+00 : f32
      %112 = vector.broadcast %cst_86 : f32 to vector<8x128xf32>
      %c0_87 = arith.constant 0 : index
      %c0_88 = arith.constant 0 : index
      %113 = vector.load %arg9[%c0_87, %c0_88] : memref<8x128xf32, #tpu.memory_space<vmem>>, vector<8x128xf32>
      tpu.vector_store %arg9[%c0_87, %c0_88], %112 {strides = array<i32>} : memref<8x128xf32, #tpu.memory_space<vmem>>, vector<8x128xf32>,
    } else {
    }
    %c0 = arith.constant 0 : index
    %c0_1 = arith.constant 0 : index
    %3 = vector.load %arg9[%c0, %c0_1] : memref<8x128xf32, #tpu.memory_space<vmem>>, vector<8x128xf32>
    %c0_i32_2 = arith.constant 0 : i32
    %4 = arith.index_cast %c0_i32_2 : i32 to index
    %c0_3 = arith.constant 0 : index
    %c0_4 = arith.constant 0 : index
    %5 = vector.load %arg2[%4, %c0_3, %c0_4] : memref<8x8x128xbf16, #tpu.memory_space<vmem>>, vector<1x8x128xbf16>
    %6 = vector.shape_cast %5 : vector<1x8x128xbf16> to vector<8x128xbf16>
    %c0_5 = arith.constant 0 : index
    %c0_6 = arith.constant 0 : index
    %7 = vector.load %arg3[%c0_5, %c0_6] : memref<128x128xbf16, #tpu.memory_space<vmem>>, vector<128x128xbf16>
    %cst = arith.constant dense<0.000000e+00> : vector<8x128xf32>
    %8 = tpu.matmul %6, %7, %cst {dimension_numbers = #tpu.dot_dimension_numbers<[1], [0], [0], [1], [0, 0, 1, 1], [], []>} : vector<8x128xbf16>, vector<128x128xbf16>, vector<8x128xf32> -> vector<8x128xf32>
    %c0_7 = arith.constant 0 : index
    %c0_8 = arith.constant 0 : index
    %9 = vector.load %arg4[%c0_7, %c0_8] : memref<1x128xf32, #tpu.memory_space<vmem>>, vector<1x128xf32>
    %10 = vector.broadcast %9 : vector<1x128xf32> to vector<8x128xf32>
    %11 = arith.addf %8, %10 : vector<8x128xf32>
    %12 = arith.truncf %3 : vector<8x128xf32> to vector<8x128xbf16>
    %c0_9 = arith.constant 0 : index
    %c0_10 = arith.constant 0 : index
    %13 = vector.load %arg5[%c0_9, %c0_10] : memref<128x128xbf16, #tpu.memory_space<vmem>>, vector<128x128xbf16>
    %cst_11 = arith.constant dense<0.000000e+00> : vector<8x128xf32>
    %14 = tpu.matmul %12, %13, %cst_11 {dimension_numbers = #tpu.dot_dimension_numbers<[1], [0], [0], [1], [0, 0, 1, 1], [], []>} : vector<8x128xbf16>, vector<128x128xbf16>, vector<8x128xf32> -> vector<8x128xf32>
    %15 = arith.addf %11, %14 : vector<8x128xf32>
    %16 = math.tanh %15 : vector<8x128xf32>
    %c1_i32 = arith.constant 1 : i32
    %17 = arith.index_cast %c1_i32 : i32 to index
    %c0_12 = arith.constant 0 : index
    %c0_13 = arith.constant 0 : index
    %18 = vector.load %arg2[%17, %c0_12, %c0_13] : memref<8x8x128xbf16, #tpu.memory_space<vmem>>, vector<1x8x128xbf16>
    %19 = vector.shape_cast %18 : vector<1x8x128xbf16> to vector<8x128xbf16>
    %c0_14 = arith.constant 0 : index
    %c0_15 = arith.constant 0 : index
    %20 = vector.load %arg3[%c0_14, %c0_15] : memref<128x128xbf16, #tpu.memory_space<vmem>>, vector<128x128xbf16>
    %cst_16 = arith.constant dense<0.000000e+00> : vector<8x128xf32>
    %21 = tpu.matmul %19, %20, %cst_16 {dimension_numbers = #tpu.dot_dimension_numbers<[1], [0], [0], [1], [0, 0, 1, 1], [], []>} : vector<8x128xbf16>, vector<128x128xbf16>, vector<8x128xf32> -> vector<8x128xf32>
    %c0_17 = arith.constant 0 : index
    %c0_18 = arith.constant 0 : index
    %22 = vector.load %arg4[%c0_17, %c0_18] : memref<1x128xf32, #tpu.memory_space<vmem>>, vector<1x128xf32>
    %23 = vector.broadcast %22 : vector<1x128xf32> to vector<8x128xf32>
    %24 = arith.addf %21, %23 : vector<8x128xf32>
    %25 = arith.truncf %16 : vector<8x128xf32> to vector<8x128xbf16>
    %c0_19 = arith.constant 0 : index
    %c0_20 = arith.constant 0 : index
    %26 = vector.load %arg5[%c0_19, %c0_20] : memref<128x128xbf16, #tpu.memory_space<vmem>>, vector<128x128xbf16>
    %cst_21 = arith.constant dense<0.000000e+00> : vector<8x128xf32>
    %27 = tpu.matmul %25, %26, %cst_21 {dimension_numbers = #tpu.dot_dimension_numbers<[1], [0], [0], [1], [0, 0, 1, 1], [], []>} : vector<8x128xbf16>, vector<128x128xbf16>, vector<8x128xf32> -> vector<8x128xf32>
    %28 = arith.addf %24, %27 : vector<8x128xf32>
    %29 = math.tanh %28 : vector<8x128xf32>
    %c2_i32 = arith.constant 2 : i32
    %30 = arith.index_cast %c2_i32 : i32 to index
    %c0_22 = arith.constant 0 : index
    %c0_23 = arith.constant 0 : index
    %31 = vector.load %arg2[%30, %c0_22, %c0_23] : memref<8x8x128xbf16, #tpu.memory_space<vmem>>, vector<1x8x128xbf16>
    %32 = vector.shape_cast %31 : vector<1x8x128xbf16> to vector<8x128xbf16>
    %c0_24 = arith.constant 0 : index
    %c0_25 = arith.constant 0 : index
    %33 = vector.load %arg3[%c0_24, %c0_25] : memref<128x128xbf16, #tpu.memory_space<vmem>>, vector<128x128xbf16>
    %cst_26 = arith.constant dense<0.000000e+00> : vector<8x128xf32>
    %34 = tpu.matmul %32, %33, %cst_26 {dimension_numbers = #tpu.dot_dimension_numbers<[1], [0], [0], [1], [0, 0, 1, 1], [], []>} : vector<8x128xbf16>, vector<128x128xbf16>, vector<8x128xf32> -> vector<8x128xf32>
    %c0_27 = arith.constant 0 : index
    %c0_28 = arith.constant 0 : index
    %35 = vector.load %arg4[%c0_27, %c0_28] : memref<1x128xf32, #tpu.memory_space<vmem>>, vector<1x128xf32>
    %36 = vector.broadcast %35 : vector<1x128xf32> to vector<8x128xf32>
    %37 = arith.addf %34, %36 : vector<8x128xf32>
    %38 = arith.truncf %29 : vector<8x128xf32> to vector<8x128xbf16>
    %c0_29 = arith.constant 0 : index
    %c0_30 = arith.constant 0 : index
    %39 = vector.load %arg5[%c0_29, %c0_30] : memref<128x128xbf16, #tpu.memory_space<vmem>>, vector<128x128xbf16>
    %cst_31 = arith.constant dense<0.000000e+00> : vector<8x128xf32>
    %40 = tpu.matmul %38, %39, %cst_31 {dimension_numbers = #tpu.dot_dimension_numbers<[1], [0], [0], [1], [0, 0, 1, 1], [], []>} : vector<8x128xbf16>, vector<128x128xbf16>, vector<8x128xf32> -> vector<8x128xf32>
    %41 = arith.addf %37, %40 : vector<8x128xf32>
    %42 = math.tanh %41 : vector<8x128xf32>
    %c3_i32 = arith.constant 3 : i32
    %43 = arith.index_cast %c3_i32 : i32 to index
    %c0_32 = arith.constant 0 : index
    %c0_33 = arith.constant 0 : index
    %44 = vector.load %arg2[%43, %c0_32, %c0_33] : memref<8x8x128xbf16, #tpu.memory_space<vmem>>, vector<1x8x128xbf16>
    %45 = vector.shape_cast %44 : vector<1x8x128xbf16> to vector<8x128xbf16>
    %c0_34 = arith.constant 0 : index
    %c0_35 = arith.constant 0 : index
    %46 = vector.load %arg3[%c0_34, %c0_35] : memref<128x128xbf16, #tpu.memory_space<vmem>>, vector<128x128xbf16>
    %cst_36 = arith.constant dense<0.000000e+00> : vector<8x128xf32>
    %47 = tpu.matmul %45, %46, %cst_36 {dimension_numbers = #tpu.dot_dimension_numbers<[1], [0], [0], [1], [0, 0, 1, 1], [], []>} : vector<8x128xbf16>, vector<128x128xbf16>, vector<8x128xf32> -> vector<8x128xf32>
    %c0_37 = arith.constant 0 : index
    %c0_38 = arith.constant 0 : index
    %48 = vector.load %arg4[%c0_37, %c0_38] : memref<1x128xf32, #tpu.memory_space<vmem>>, vector<1x128xf32>
    %49 = vector.broadcast %48 : vector<1x128xf32> to vector<8x128xf32>
    %50 = arith.addf %47, %49 : vector<8x128xf32>
    %51 = arith.truncf %42 : vector<8x128xf32> to vector<8x128xbf16>
    %c0_39 = arith.constant 0 : index
    %c0_40 = arith.constant 0 : index
    %52 = vector.load %arg5[%c0_39, %c0_40] : memref<128x128xbf16, #tpu.memory_space<vmem>>, vector<128x128xbf16>
    %cst_41 = arith.constant dense<0.000000e+00> : vector<8x128xf32>
    %53 = tpu.matmul %51, %52, %cst_41 {dimension_numbers = #tpu.dot_dimension_numbers<[1], [0], [0], [1], [0, 0, 1, 1], [], []>} : vector<8x128xbf16>, vector<128x128xbf16>, vector<8x128xf32> -> vector<8x128xf32>
    %54 = arith.addf %50, %53 : vector<8x128xf32>
    %55 = math.tanh %54 : vector<8x128xf32>
    %c4_i32 = arith.constant 4 : i32
    %56 = arith.index_cast %c4_i32 : i32 to index
    %c0_42 = arith.constant 0 : index
    %c0_43 = arith.constant 0 : index
    %57 = vector.load %arg2[%56, %c0_42, %c0_43] : memref<8x8x128xbf16, #tpu.memory_space<vmem>>, vector<1x8x128xbf16>
    %58 = vector.shape_cast %57 : vector<1x8x128xbf16> to vector<8x128xbf16>
    %c0_44 = arith.constant 0 : index
    %c0_45 = arith.constant 0 : index
    %59 = vector.load %arg3[%c0_44, %c0_45] : memref<128x128xbf16, #tpu.memory_space<vmem>>, vector<128x128xbf16>
    %cst_46 = arith.constant dense<0.000000e+00> : vector<8x128xf32>
    %60 = tpu.matmul %58, %59, %cst_46 {dimension_numbers = #tpu.dot_dimension_numbers<[1], [0], [0], [1], [0, 0, 1, 1], [], []>} : vector<8x128xbf16>, vector<128x128xbf16>, vector<8x128xf32> -> vector<8x128xf32>
    %c0_47 = arith.constant 0 : index
    %c0_48 = arith.constant 0 : index
    %61 = vector.load %arg4[%c0_47, %c0_48] : memref<1x128xf32, #tpu.memory_space<vmem>>, vector<1x128xf32>
    %62 = vector.broadcast %61 : vector<1x128xf32> to vector<8x128xf32>
    %63 = arith.addf %60, %62 : vector<8x128xf32>
    %64 = arith.truncf %55 : vector<8x128xf32> to vector<8x128xbf16>
    %c0_49 = arith.constant 0 : index
    %c0_50 = arith.constant 0 : index
    %65 = vector.load %arg5[%c0_49, %c0_50] : memref<128x128xbf16, #tpu.memory_space<vmem>>, vector<128x128xbf16>
    %cst_51 = arith.constant dense<0.000000e+00> : vector<8x128xf32>
    %66 = tpu.matmul %64, %65, %cst_51 {dimension_numbers = #tpu.dot_dimension_numbers<[1], [0], [0], [1], [0, 0, 1, 1], [], []>} : vector<8x128xbf16>, vector<128x128xbf16>, vector<8x128xf32> -> vector<8x128xf32>
    %67 = arith.addf %63, %66 : vector<8x128xf32>
    %68 = math.tanh %67 : vector<8x128xf32>
    %c5_i32 = arith.constant 5 : i32
    %69 = arith.index_cast %c5_i32 : i32 to index
    %c0_52 = arith.constant 0 : index
    %c0_53 = arith.constant 0 : index
    %70 = vector.load %arg2[%69, %c0_52, %c0_53] : memref<8x8x128xbf16, #tpu.memory_space<vmem>>, vector<1x8x128xbf16>
    %71 = vector.shape_cast %70 : vector<1x8x128xbf16> to vector<8x128xbf16>
    %c0_54 = arith.constant 0 : index
    %c0_55 = arith.constant 0 : index
    %72 = vector.load %arg3[%c0_54, %c0_55] : memref<128x128xbf16, #tpu.memory_space<vmem>>, vector<128x128xbf16>
    %cst_56 = arith.constant dense<0.000000e+00> : vector<8x128xf32>
    %73 = tpu.matmul %71, %72, %cst_56 {dimension_numbers = #tpu.dot_dimension_numbers<[1], [0], [0], [1], [0, 0, 1, 1], [], []>} : vector<8x128xbf16>, vector<128x128xbf16>, vector<8x128xf32> -> vector<8x128xf32>
    %c0_57 = arith.constant 0 : index
    %c0_58 = arith.constant 0 : index
    %74 = vector.load %arg4[%c0_57, %c0_58] : memref<1x128xf32, #tpu.memory_space<vmem>>, vector<1x128xf32>
    %75 = vector.broadcast %74 : vector<1x128xf32> to vector<8x128xf32>
    %76 = arith.addf %73, %75 : vector<8x128xf32>
    %77 = arith.truncf %68 : vector<8x128xf32> to vector<8x128xbf16>
    %c0_59 = arith.constant 0 : index
    %c0_60 = arith.constant 0 : index
    %78 = vector.load %arg5[%c0_59, %c0_60] : memref<128x128xbf16, #tpu.memory_space<vmem>>, vector<128x128xbf16>
    %cst_61 = arith.constant dense<0.000000e+00> : vector<8x128xf32>
    %79 = tpu.matmul %77, %78, %cst_61 {dimension_numbers = #tpu.dot_dimension_numbers<[1], [0], [0], [1], [0, 0, 1, 1], [], []>} : vector<8x128xbf16>, vector<128x128xbf16>, vector<8x128xf32> -> vector<8x128xf32>
    %80 = arith.addf %76, %79 : vector<8x128xf32>
    %81 = math.tanh %80 : vector<8x128xf32>
    %c6_i32 = arith.constant 6 : i32
    %82 = arith.index_cast %c6_i32 : i32 to index
    %c0_62 = arith.constant 0 : index
    %c0_63 = arith.constant 0 : index
    %83 = vector.load %arg2[%82, %c0_62, %c0_63] : memref<8x8x128xbf16, #tpu.memory_space<vmem>>, vector<1x8x128xbf16>
    %84 = vector.shape_cast %83 : vector<1x8x128xbf16> to vector<8x128xbf16>
    %c0_64 = arith.constant 0 : index
    %c0_65 = arith.constant 0 : index
    %85 = vector.load %arg3[%c0_64, %c0_65] : memref<128x128xbf16, #tpu.memory_space<vmem>>, vector<128x128xbf16>
    %cst_66 = arith.constant dense<0.000000e+00> : vector<8x128xf32>
    %86 = tpu.matmul %84, %85, %cst_66 {dimension_numbers = #tpu.dot_dimension_numbers<[1], [0], [0], [1], [0, 0, 1, 1], [], []>} : vector<8x128xbf16>, vector<128x128xbf16>, vector<8x128xf32> -> vector<8x128xf32>
    %c0_67 = arith.constant 0 : index
    %c0_68 = arith.constant 0 : index
    %87 = vector.load %arg4[%c0_67, %c0_68] : memref<1x128xf32, #tpu.memory_space<vmem>>, vector<1x128xf32>
    %88 = vector.broadcast %87 : vector<1x128xf32> to vector<8x128xf32>
    %89 = arith.addf %86, %88 : vector<8x128xf32>
    %90 = arith.truncf %81 : vector<8x128xf32> to vector<8x128xbf16>
    %c0_69 = arith.constant 0 : index
    %c0_70 = arith.constant 0 : index
    %91 = vector.load %arg5[%c0_69, %c0_70] : memref<128x128xbf16, #tpu.memory_space<vmem>>, vector<128x128xbf16>
    %cst_71 = arith.constant dense<0.000000e+00> : vector<8x128xf32>
    %92 = tpu.matmul %90, %91, %cst_71 {dimension_numbers = #tpu.dot_dimension_numbers<[1], [0], [0], [1], [0, 0, 1, 1], [], []>} : vector<8x128xbf16>, vector<128x128xbf16>, vector<8x128xf32> -> vector<8x128xf32>
    %93 = arith.addf %89, %92 : vector<8x128xf32>
    %94 = math.tanh %93 : vector<8x128xf32>
    %c7_i32 = arith.constant 7 : i32
    %95 = arith.index_cast %c7_i32 : i32 to index
    %c0_72 = arith.constant 0 : index
    %c0_73 = arith.constant 0 : index
    %96 = vector.load %arg2[%95, %c0_72, %c0_73] : memref<8x8x128xbf16, #tpu.memory_space<vmem>>, vector<1x8x128xbf16>
    %97 = vector.shape_cast %96 : vector<1x8x128xbf16> to vector<8x128xbf16>
    %c0_74 = arith.constant 0 : index
    %c0_75 = arith.constant 0 : index
    %98 = vector.load %arg3[%c0_74, %c0_75] : memref<128x128xbf16, #tpu.memory_space<vmem>>, vector<128x128xbf16>
    %cst_76 = arith.constant dense<0.000000e+00> : vector<8x128xf32>
    %99 = tpu.matmul %97, %98, %cst_76 {dimension_numbers = #tpu.dot_dimension_numbers<[1], [0], [0], [1], [0, 0, 1, 1], [], []>} : vector<8x128xbf16>, vector<128x128xbf16>, vector<8x128xf32> -> vector<8x128xf32>
    %c0_77 = arith.constant 0 : index
    %c0_78 = arith.constant 0 : index
    %100 = vector.load %arg4[%c0_77, %c0_78] : memref<1x128xf32, #tpu.memory_space<vmem>>, vector<1x128xf32>
    %101 = vector.broadcast %100 : vector<1x128xf32> to vector<8x128xf32>
    %102 = arith.addf %99, %101 : vector<8x128xf32>
    %103 = arith.truncf %94 : vector<8x128xf32> to vector<8x128xbf16>
    %c0_79 = arith.constant 0 : index
    %c0_80 = arith.constant 0 : index
    %104 = vector.load %arg5[%c0_79, %c0_80] : memref<128x128xbf16, #tpu.memory_space<vmem>>, vector<128x128xbf16>
    %cst_81 = arith.constant dense<0.000000e+00> : vector<8x128xf32>
    %105 = tpu.matmul %103, %104, %cst_81 {dimension_numbers = #tpu.dot_dimension_numbers<[1], [0], [0], [1], [0, 0, 1, 1], [], []>} : vector<8x128xbf16>, vector<128x128xbf16>, vector<8x128xf32> -> vector<8x128xf32>
    %106 = arith.addf %102, %105 : vector<8x128xf32>
    %107 = math.tanh %106 : vector<8x128xf32>
    %c8_i32 = arith.constant 8 : i32
    %c0_82 = arith.constant 0 : index
    %c0_83 = arith.constant 0 : index
    %108 = vector.load %arg9[%c0_82, %c0_83] : memref<8x128xf32, #tpu.memory_space<vmem>>, vector<8x128xf32>
    tpu.vector_store %arg9[%c0_82, %c0_83], %107 {strides = array<i32>} : memref<8x128xf32, #tpu.memory_space<vmem>>, vector<8x128xf32>,
    %c0_i32_84 = arith.constant 0 : i32
    %109 = arith.cmpi eq, %arg1, %c0_i32_84 : i32
    %110 = arith.extui %109 : i1 to i32
    %c0_i32_85 = arith.constant 0 : i32
    %111 = arith.cmpi ne, %110, %c0_i32_85 : i32
    scf.if %111 {
      %112 = arith.truncf %107 : vector<8x128xf32> to vector<8x128xbf16>
      %c0_86 = arith.constant 0 : index
      %c0_87 = arith.constant 0 : index
      %113 = vector.load %arg6[%c0_86, %c0_87] : memref<128x128xbf16, #tpu.memory_space<vmem>>, vector<128x128xbf16>
      %cst_88 = arith.constant dense<0.000000e+00> : vector<8x128xf32>
      %114 = tpu.matmul %112, %113, %cst_88 {dimension_numbers = #tpu.dot_dimension_numbers<[1], [0], [0], [1], [0, 0, 1, 1], [], []>} : vector<8x128xbf16>, vector<128x128xbf16>, vector<8x128xf32> -> vector<8x128xf32>
      %c0_89 = arith.constant 0 : index
      %c0_90 = arith.constant 0 : index
      %115 = vector.load %arg7[%c0_89, %c0_90] : memref<1x128xf32, #tpu.memory_space<vmem>>, vector<1x128xf32>
      %116 = vector.broadcast %115 : vector<1x128xf32> to vector<8x128xf32>
      %117 = arith.addf %114, %116 : vector<8x128xf32>
      %c0_91 = arith.constant 0 : index
      %c0_92 = arith.constant 0 : index
      %118 = vector.load %arg8[%c0_91, %c0_92] : memref<8x128xf32, #tpu.memory_space<vmem>>, vector<8x128xf32>
      tpu.vector_store %arg8[%c0_91, %c0_92], %117 {strides = array<i32>} : memref<8x128xf32, #tpu.memory_space<vmem>>, vector<8x128xf32>,
    } else {
    }
    return
  }
  func.func @transform_0(%arg0: i32, %arg1: i32) -> (i32, i32, i32) {
    %c0_i32 = arith.constant 0 : i32
    %c0_i32_0 = arith.constant 0 : i32
    return %arg1, %arg0, %c0_i32 : i32, i32, i32
  }
  func.func @transform_1(%arg0: i32, %arg1: i32) -> (i32, i32) {
    %c0_i32 = arith.constant 0 : i32
    %c0_i32_0 = arith.constant 0 : i32
    %c0_i32_1 = arith.constant 0 : i32
    return %c0_i32, %c0_i32_0 : i32, i32
  }
  func.func @transform_2(%arg0: i32, %arg1: i32) -> (i32, i32) {
    %c0_i32 = arith.constant 0 : i32
    %c0_i32_0 = arith.constant 0 : i32
    %c0_i32_1 = arith.constant 0 : i32
    return %c0_i32, %c0_i32_0 : i32, i32
  }
  func.func @transform_3(%arg0: i32, %arg1: i32) -> (i32, i32) {
    %c0_i32 = arith.constant 0 : i32
    %c0_i32_0 = arith.constant 0 : i32
    %c0_i32_1 = arith.constant 0 : i32
    return %c0_i32, %c0_i32_0 : i32, i32
  }
  func.func @transform_4(%arg0: i32, %arg1: i32) -> (i32, i32) {
    %c0_i32 = arith.constant 0 : i32
    %c0_i32_0 = arith.constant 0 : i32
    %c0_i32_1 = arith.constant 0 : i32
    return %c0_i32, %c0_i32_0 : i32, i32
  }
  func.func @transform_5(%arg0: i32, %arg1: i32) -> (i32, i32) {
    %c0_i32 = arith.constant 0 : i32
    %c0_i32_0 = arith.constant 0 : i32
    %c0_i32_1 = arith.constant 0 : i32
    return %c0_i32, %c0_i32_0 : i32, i32
  }
  func.func @transform_6(%arg0: i32, %arg1: i32) -> (i32, i32) {
    %c0_i32 = arith.constant 0 : i32
    %c0_i32_0 = arith.constant 0 : i32
    return %arg0, %c0_i32 : i32, i32
  }
}

</mosaic_0001>

<llo_original>
// kernel: rnn_forward.1
$region0: #{rnn_forward.1}
  #allocation0 [shape = 'u32[]', space=smem, size = 0x4, offset = 0x4, fixed_abs, tag = 'smem constant byte address 0x4 - core index']
  #allocation1 [shape = 'u32[72,128]{1,0:T(1,128)}', space=vmem, size = 0x9000, scoped, tag = 'internal scratch']
  #allocation2 [shape = 'f32[8,128]{1,0:T(8,128)}', space=vmem, size = 0x1000, scoped, tag = 'scratch operand']
  %s0 = inlined_call_operand.vmem [shape: bf16[8,8,128], index: 0, kind: input, shape index: {}]
  %s1 = inlined_call_operand.vmem [shape: bf16[128,128], index: 1, kind: input, shape index: {}]
  %s2 = inlined_call_operand.vmem [shape: f32[1,128], index: 2, kind: input, shape index: {}]
  %s3 = inlined_call_operand.vmem [shape: bf16[128,128], index: 3, kind: input, shape index: {}]
  %s4 = inlined_call_operand.vmem [shape: bf16[128,128], index: 4, kind: input, shape index: {}]
  %s5 = inlined_call_operand.vmem [shape: f32[1,128], index: 5, kind: input, shape index: {}]
  %s6 = inlined_call_operand.vmem [shape: f32[8,128], index: 6, kind: output, shape index: {}]
  %s7 = sld [smem:[#allocation0]]
  $region42: #{rnn_forward.1} parent=0
    _
  %s9 = ssub.s32 1, %s7
  %s10 = scalar_select 0, %s9, %s7
  // Predicated region
  $region2: #{rnn_forward.1} parent=0 // pred_check
    _
  $region3: #{rnn_forward.1} parent=0 // pred_check_branch
    %12 = sbr.rel (0) target = $region5
  $region4: #{rnn_forward.1} parent=0 // pred_region
    _
  $region5: #{rnn_forward.1} parent=0 // pred_fallthru
    _
  // Predicated region
  $region6: #{rnn_forward.1} parent=0 // pred_check
    _
  $region7: #{rnn_forward.1} parent=0 // pred_check_branch
    %14 = sbr.rel (0) target = $region9
  $region8: #{rnn_forward.1} parent=0 // pred_region
    _
  $region9: #{rnn_forward.1} parent=0 // pred_fallthru
    _
  // Predicated region
  $region10: #{rnn_forward.1} parent=0 // pred_check
    _
  $region11: #{rnn_forward.1} parent=0 // pred_check_branch
    %16 = sbr.rel (0) target = $region13
  $region12: #{rnn_forward.1} parent=0 // pred_region
    _
  $region13: #{rnn_forward.1} parent=0 // pred_fallthru
    _
  // Predicated region
  $region14: #{rnn_forward.1} parent=0 // pred_check
    _
  $region15: #{rnn_forward.1} parent=0 // pred_check_branch
    %18 = sbr.rel (0) target = $region17
  $region16: #{rnn_forward.1} parent=0 // pred_region
    _
  $region17: #{rnn_forward.1} parent=0 // pred_fallthru
    _
  // Predicated region
  $region18: #{rnn_forward.1} parent=0 // pred_check
    _
  $region19: #{rnn_forward.1} parent=0 // pred_check_branch
    %20 = sbr.rel (0) target = $region21
  $region20: #{rnn_forward.1} parent=0 // pred_region
    _
  $region21: #{rnn_forward.1} parent=0 // pred_fallthru
    _
  // Predicated region
  $region22: #{rnn_forward.1} parent=0 // pred_check
    _
  $region23: #{rnn_forward.1} parent=0 // pred_check_branch
    %22 = sbr.rel (0) target = $region25
  $region24: #{rnn_forward.1} parent=0 // pred_region
    _
  $region25: #{rnn_forward.1} parent=0 // pred_fallthru
    _
  %p23 = scmp.eq.s32.totalorder 0, 0
  // Predicated region
  $region26: #{rnn_forward.1} parent=0 // pred_check
    %p24 = pneg %p23
  $region27: #{rnn_forward.1} parent=0 // pred_check_branch
    %26 = sbr.rel (%p24) target = $region29
  $region28: #{rnn_forward.1} parent=0 // pred_region
    %27 = vst [vmem:[#allocation2] sm:$0xff] 0.0
  $region29: #{rnn_forward.1} parent=0 // pred_fallthru
    _
  %v28 = vld [vmem:[#allocation2] sm:$0xff]
  %v29 = vld [vmem:[%s0] sm:$0xf]
  %v30 = vld [vmem:[%s1] sm:$0xf]
  %v31 = vld [vmem:[%s1 + $0x4] sm:$0xf]
  %v32 = vld [vmem:[%s1 + $0x8] sm:$0xf]
  %v33 = vld [vmem:[%s1 + $0xc] sm:$0xf]
  %v34 = vld [vmem:[%s1 + $0x10] sm:$0xf]
  %v35 = vld [vmem:[%s1 + $0x14] sm:$0xf]
  %v36 = vld [vmem:[%s1 + $0x18] sm:$0xf]
  %v37 = vld [vmem:[%s1 + $0x1c] sm:$0xf]
  %v38 = vld [vmem:[%s1 + $0x20] sm:$0xf]
  %v39 = vld [vmem:[%s1 + $0x24] sm:$0xf]
  %v40 = vld [vmem:[%s1 + $0x28] sm:$0xf]
  %v41 = vld [vmem:[%s1 + $0x2c] sm:$0xf]
  %v42 = vld [vmem:[%s1 + $0x30] sm:$0xf]
  %v43 = vld [vmem:[%s1 + $0x34] sm:$0xf]
  %v44 = vld [vmem:[%s1 + $0x38] sm:$0xf]
  %v45 = vld [vmem:[%s1 + $0x3c] sm:$0xf]
  %v46 = vld [vmem:[%s2] sm:$0x1]
  %v48 = vperm.slane %v46, 0
  %v66 = vunpack.c.l.b16 %v30
  %v67 = vunpack.c.l.b16 %v31
  %v68 = vunpack.c.l.b16 %v32
  %v69 = vunpack.c.l.b16 %v33
  %v70 = vunpack.c.l.b16 %v34
  %v71 = vunpack.c.l.b16 %v35
  %v72 = vunpack.c.l.b16 %v36
  %v73 = vunpack.c.l.b16 %v37
  %v74 = vunpack.c.l.b16 %v38
  %v75 = vunpack.c.l.b16 %v39
  %v76 = vunpack.c.l.b16 %v40
  %v77 = vunpack.c.l.b16 %v41
  %v78 = vunpack.c.l.b16 %v42
  %v79 = vunpack.c.l.b16 %v43
  %v80 = vunpack.c.l.b16 %v44
  %v81 = vunpack.c.l.b16 %v45
  %v82 = vpack.c.b16 %v67, %v66
  %v83 = vpack.c.b16 %v69, %v68
  %v84 = vpack.c.b16 %v71, %v70
  %v85 = vpack.c.b16 %v73, %v72
  %v86 = vpack.c.b16 %v75, %v74
  %v87 = vpack.c.b16 %v77, %v76
  %v88 = vpack.c.b16 %v79, %v78
  %v89 = vpack.c.b16 %v81, %v80
  %98 = vmatpush.bf16.msra.mxu0 %v89
  %99 = vmatpush.bf16.msra.mxu0 %v88
  %100 = vmatpush.bf16.msra.mxu0 %v87
  %101 = vmatpush.bf16.msra.mxu0 %v86
  %102 = vmatpush.bf16.msra.mxu0 %v85
  %103 = vmatpush.bf16.msra.mxu0 %v84
  %104 = vmatpush.bf16.msra.mxu0 %v83
  %105 = vmatpush.bf16.msra.mxu0 %v82
  %106 = vmatmul.bf16.gmra.mxu0 %v29
  %v107 = vpop.f32.mrf.mxu0
  %v108 = vadd.f32 %v48, %v107
  %v109 = vpop.f32.mrf.mxu0
  %110 = vdwg.mxu0
  %v111 = vpack.c.bf16 %v28, %v28
  %v112 = vld [vmem:[%s3] sm:$0xf]
  %v113 = vld [vmem:[%s3 + $0x4] sm:$0xf]
  %v114 = vld [vmem:[%s3 + $0x8] sm:$0xf]
  %v115 = vld [vmem:[%s3 + $0xc] sm:$0xf]
  %v116 = vld [vmem:[%s3 + $0x10] sm:$0xf]
  %v117 = vld [vmem:[%s3 + $0x14] sm:$0xf]
  %v118 = vld [vmem:[%s3 + $0x18] sm:$0xf]
  %v119 = vld [vmem:[%s3 + $0x1c] sm:$0xf]
  %v120 = vld [vmem:[%s3 + $0x20] sm:$0xf]
  %v121 = vld [vmem:[%s3 + $0x24] sm:$0xf]
  %v122 = vld [vmem:[%s3 + $0x28] sm:$0xf]
  %v123 = vld [vmem:[%s3 + $0x2c] sm:$0xf]
  %v124 = vld [vmem:[%s3 + $0x30] sm:$0xf]
  %v125 = vld [vmem:[%s3 + $0x34] sm:$0xf]
  %v126 = vld [vmem:[%s3 + $0x38] sm:$0xf]
  %v127 = vld [vmem:[%s3 + $0x3c] sm:$0xf]
  %v144 = vunpack.c.l.b16 %v112
  %v145 = vunpack.c.l.b16 %v113
  %v146 = vunpack.c.l.b16 %v114
  %v147 = vunpack.c.l.b16 %v115
  %v148 = vunpack.c.l.b16 %v116
  %v149 = vunpack.c.l.b16 %v117
  %v150 = vunpack.c.l.b16 %v118
  %v151 = vunpack.c.l.b16 %v119
  %v152 = vunpack.c.l.b16 %v120
  %v153 = vunpack.c.l.b16 %v121
  %v154 = vunpack.c.l.b16 %v122
  %v155 = vunpack.c.l.b16 %v123
  %v156 = vunpack.c.l.b16 %v124
  %v157 = vunpack.c.l.b16 %v125
  %v158 = vunpack.c.l.b16 %v126
  %v159 = vunpack.c.l.b16 %v127
  %v160 = vpack.c.b16 %v145, %v144
  %v161 = vpack.c.b16 %v147, %v146
  %v162 = vpack.c.b16 %v149, %v148
  %v163 = vpack.c.b16 %v151, %v150
  %v164 = vpack.c.b16 %v153, %v152
  %v165 = vpack.c.b16 %v155, %v154
  %v166 = vpack.c.b16 %v157, %v156
  %v167 = vpack.c.b16 %v159, %v158
  %176 = vmatpush.bf16.msra.mxu0 %v167
  %177 = vmatpush.bf16.msra.mxu0 %v166
  %178 = vmatpush.bf16.msra.mxu0 %v165
  %179 = vmatpush.bf16.msra.mxu0 %v164
  %180 = vmatpush.bf16.msra.mxu0 %v163
  %181 = vmatpush.bf16.msra.mxu0 %v162
  %182 = vmatpush.bf16.msra.mxu0 %v161
  %183 = vmatpush.bf16.msra.mxu0 %v160
  %184 = vmatmul.bf16.gmra.mxu0 %v111
  %v185 = vpop.f32.mrf.mxu0
  %v186 = vadd.f32 0.0, %v185
  %v187 = vpop.f32.mrf.mxu0
  %188 = vdwg.mxu0
  %v189 = vadd.f32 %v108, %v186
  %v190 = vtanh.pop %v189
  %s191 = scalar_lea.vmem %s0, 4
  %v192 = vld [vmem:[%s191] sm:$0xf]
  %193 = vmatpush.bf16.msra.mxu0 %v89
  %194 = vmatpush.bf16.msra.mxu0 %v88
  %195 = vmatpush.bf16.msra.mxu0 %v87
  %196 = vmatpush.bf16.msra.mxu0 %v86
  %197 = vmatpush.bf16.msra.mxu0 %v85
  %198 = vmatpush.bf16.msra.mxu0 %v84
  %199 = vmatpush.bf16.msra.mxu0 %v83
  %200 = vmatpush.bf16.msra.mxu0 %v82
  %201 = vmatmul.bf16.gmra.mxu0 %v192
  %v202 = vpop.f32.mrf.mxu0
  %v203 = vadd.f32 %v48, %v202
  %v204 = vpop.f32.mrf.mxu0
  %205 = vdwg.mxu0
  %v206 = vpack.c.bf16 %v190, %v190
  %207 = vmatpush.bf16.msra.mxu0 %v167
  %208 = vmatpush.bf16.msra.mxu0 %v166
  %209 = vmatpush.bf16.msra.mxu0 %v165
  %210 = vmatpush.bf16.msra.mxu0 %v164
  %211 = vmatpush.bf16.msra.mxu0 %v163
  %212 = vmatpush.bf16.msra.mxu0 %v162
  %213 = vmatpush.bf16.msra.mxu0 %v161
  %214 = vmatpush.bf16.msra.mxu0 %v160
  %215 = vmatmul.bf16.gmra.mxu0 %v206
  %v216 = vpop.f32.mrf.mxu0
  %v217 = vadd.f32 0.0, %v216
  %v218 = vpop.f32.mrf.mxu0
  %219 = vdwg.mxu0
  %v220 = vadd.f32 %v203, %v217
  %v221 = vtanh.pop %v220
  %s222 = scalar_lea.vmem %s0, 8
  %v223 = vld [vmem:[%s222] sm:$0xf]
  %224 = vmatpush.bf16.msra.mxu0 %v89
  %225 = vmatpush.bf16.msra.mxu0 %v88
  %226 = vmatpush.bf16.msra.mxu0 %v87
  %227 = vmatpush.bf16.msra.mxu0 %v86
  %228 = vmatpush.bf16.msra.mxu0 %v85
  %229 = vmatpush.bf16.msra.mxu0 %v84
  %230 = vmatpush.bf16.msra.mxu0 %v83
  %231 = vmatpush.bf16.msra.mxu0 %v82
  %232 = vmatmul.bf16.gmra.mxu0 %v223
  %v233 = vpop.f32.mrf.mxu0
  %v234 = vadd.f32 %v48, %v233
  %v235 = vpop.f32.mrf.mxu0
  %236 = vdwg.mxu0
  %v237 = vpack.c.bf16 %v221, %v221
  %238 = vmatpush.bf16.msra.mxu0 %v167
  %239 = vmatpush.bf16.msra.mxu0 %v166
  %240 = vmatpush.bf16.msra.mxu0 %v165
  %241 = vmatpush.bf16.msra.mxu0 %v164
  %242 = vmatpush.bf16.msra.mxu0 %v163
  %243 = vmatpush.bf16.msra.mxu0 %v162
  %244 = vmatpush.bf16.msra.mxu0 %v161
  %245 = vmatpush.bf16.msra.mxu0 %v160
  %246 = vmatmul.bf16.gmra.mxu0 %v237
  %v247 = vpop.f32.mrf.mxu0
  %v248 = vadd.f32 0.0, %v247
  %v249 = vpop.f32.mrf.mxu0
  %250 = vdwg.mxu0
  %v251 = vadd.f32 %v234, %v248
  %v252 = vtanh.pop %v251
  %s253 = scalar_lea.vmem %s0, 12
  %v254 = vld [vmem:[%s253] sm:$0xf]
  %255 = vmatpush.bf16.msra.mxu0 %v89
  %256 = vmatpush.bf16.msra.mxu0 %v88
  %257 = vmatpush.bf16.msra.mxu0 %v87
  %258 = vmatpush.bf16.msra.mxu0 %v86
  %259 = vmatpush.bf16.msra.mxu0 %v85
  %260 = vmatpush.bf16.msra.mxu0 %v84
  %261 = vmatpush.bf16.msra.mxu0 %v83
  %262 = vmatpush.bf16.msra.mxu0 %v82
  %263 = vmatmul.bf16.gmra.mxu0 %v254
  %v264 = vpop.f32.mrf.mxu0
  %v265 = vadd.f32 %v48, %v264
  %v266 = vpop.f32.mrf.mxu0
  %267 = vdwg.mxu0
  %v268 = vpack.c.bf16 %v252, %v252
  %269 = vmatpush.bf16.msra.mxu0 %v167
  %270 = vmatpush.bf16.msra.mxu0 %v166
  %271 = vmatpush.bf16.msra.mxu0 %v165
  %272 = vmatpush.bf16.msra.mxu0 %v164
  %273 = vmatpush.bf16.msra.mxu0 %v163
  %274 = vmatpush.bf16.msra.mxu0 %v162
  %275 = vmatpush.bf16.msra.mxu0 %v161
  %276 = vmatpush.bf16.msra.mxu0 %v160
  %277 = vmatmul.bf16.gmra.mxu0 %v268
  %v278 = vpop.f32.mrf.mxu0
  %v279 = vadd.f32 0.0, %v278
  %v280 = vpop.f32.mrf.mxu0
  %281 = vdwg.mxu0
  %v282 = vadd.f32 %v265, %v279
  %v283 = vtanh.pop %v282
  %s284 = scalar_lea.vmem %s0, 16
  %v285 = vld [vmem:[%s284] sm:$0xf]
  %286 = vmatpush.bf16.msra.mxu0 %v89
  %287 = vmatpush.bf16.msra.mxu0 %v88
  %288 = vmatpush.bf16.msra.mxu0 %v87
  %289 = vmatpush.bf16.msra.mxu0 %v86
  %290 = vmatpush.bf16.msra.mxu0 %v85
  %291 = vmatpush.bf16.msra.mxu0 %v84
  %292 = vmatpush.bf16.msra.mxu0 %v83
  %293 = vmatpush.bf16.msra.mxu0 %v82
  %294 = vmatmul.bf16.gmra.mxu0 %v285
  %v295 = vpop.f32.mrf.mxu0
  %v296 = vadd.f32 %v48, %v295
  %v297 = vpop.f32.mrf.mxu0
  %298 = vdwg.mxu0
  %v299 = vpack.c.bf16 %v283, %v283
  %300 = vmatpush.bf16.msra.mxu0 %v167
  %301 = vmatpush.bf16.msra.mxu0 %v166
  %302 = vmatpush.bf16.msra.mxu0 %v165
  %303 = vmatpush.bf16.msra.mxu0 %v164
  %304 = vmatpush.bf16.msra.mxu0 %v163
  %305 = vmatpush.bf16.msra.mxu0 %v162
  %306 = vmatpush.bf16.msra.mxu0 %v161
  %307 = vmatpush.bf16.msra.mxu0 %v160
  %308 = vmatmul.bf16.gmra.mxu0 %v299
  %v309 = vpop.f32.mrf.mxu0
  %v310 = vadd.f32 0.0, %v309
  %v311 = vpop.f32.mrf.mxu0
  %312 = vdwg.mxu0
  %v313 = vadd.f32 %v296, %v310
  %v314 = vtanh.pop %v313
  %s315 = scalar_lea.vmem %s0, 20
  %v316 = vld [vmem:[%s315] sm:$0xf]
  %317 = vmatpush.bf16.msra.mxu0 %v89
  %318 = vmatpush.bf16.msra.mxu0 %v88
  %319 = vmatpush.bf16.msra.mxu0 %v87
  %320 = vmatpush.bf16.msra.mxu0 %v86
  %321 = vmatpush.bf16.msra.mxu0 %v85
  %322 = vmatpush.bf16.msra.mxu0 %v84
  %323 = vmatpush.bf16.msra.mxu0 %v83
  %324 = vmatpush.bf16.msra.mxu0 %v82
  %325 = vmatmul.bf16.gmra.mxu0 %v316
  %v326 = vpop.f32.mrf.mxu0
  %v327 = vadd.f32 %v48, %v326
  %v328 = vpop.f32.mrf.mxu0
  %329 = vdwg.mxu0
  %v330 = vpack.c.bf16 %v314, %v314
  %331 = vmatpush.bf16.msra.mxu0 %v167
  %332 = vmatpush.bf16.msra.mxu0 %v166
  %333 = vmatpush.bf16.msra.mxu0 %v165
  %334 = vmatpush.bf16.msra.mxu0 %v164
  %335 = vmatpush.bf16.msra.mxu0 %v163
  %336 = vmatpush.bf16.msra.mxu0 %v162
  %337 = vmatpush.bf16.msra.mxu0 %v161
  %338 = vmatpush.bf16.msra.mxu0 %v160
  %339 = vmatmul.bf16.gmra.mxu0 %v330
  %v340 = vpop.f32.mrf.mxu0
  %v341 = vadd.f32 0.0, %v340
  %v342 = vpop.f32.mrf.mxu0
  %343 = vdwg.mxu0
  %v344 = vadd.f32 %v327, %v341
  %v345 = vtanh.pop %v344
  %s346 = scalar_lea.vmem %s0, 24
  %v347 = vld [vmem:[%s346] sm:$0xf]
  %348 = vmatpush.bf16.msra.mxu0 %v89
  %349 = vmatpush.bf16.msra.mxu0 %v88
  %350 = vmatpush.bf16.msra.mxu0 %v87
  %351 = vmatpush.bf16.msra.mxu0 %v86
  %352 = vmatpush.bf16.msra.mxu0 %v85
  %353 = vmatpush.bf16.msra.mxu0 %v84
  %354 = vmatpush.bf16.msra.mxu0 %v83
  %355 = vmatpush.bf16.msra.mxu0 %v82
  %356 = vmatmul.bf16.gmra.mxu0 %v347
  %v357 = vpop.f32.mrf.mxu0
  %v358 = vadd.f32 %v48, %v357
  %v359 = vpop.f32.mrf.mxu0
  %360 = vdwg.mxu0
  %v361 = vpack.c.bf16 %v345, %v345
  %362 = vmatpush.bf16.msra.mxu0 %v167
  %363 = vmatpush.bf16.msra.mxu0 %v166
  %364 = vmatpush.bf16.msra.mxu0 %v165
  %365 = vmatpush.bf16.msra.mxu0 %v164
  %366 = vmatpush.bf16.msra.mxu0 %v163
  %367 = vmatpush.bf16.msra.mxu0 %v162
  %368 = vmatpush.bf16.msra.mxu0 %v161
  %369 = vmatpush.bf16.msra.mxu0 %v160
  %370 = vmatmul.bf16.gmra.mxu0 %v361
  %v371 = vpop.f32.mrf.mxu0
  %v372 = vadd.f32 0.0, %v371
  %v373 = vpop.f32.mrf.mxu0
  %374 = vdwg.mxu0
  %v375 = vadd.f32 %v358, %v372
  %v376 = vtanh.pop %v375
  %s377 = scalar_lea.vmem %s0, 28
  %v378 = vld [vmem:[%s377] sm:$0xf]
  %379 = vmatpush.bf16.msra.mxu0 %v89
  %380 = vmatpush.bf16.msra.mxu0 %v88
  %381 = vmatpush.bf16.msra.mxu0 %v87
  %382 = vmatpush.bf16.msra.mxu0 %v86
  %383 = vmatpush.bf16.msra.mxu0 %v85
  %384 = vmatpush.bf16.msra.mxu0 %v84
  %385 = vmatpush.bf16.msra.mxu0 %v83
  %386 = vmatpush.bf16.msra.mxu0 %v82
  %387 = vmatmul.bf16.gmra.mxu0 %v378
  %v388 = vpop.f32.mrf.mxu0
  %v389 = vadd.f32 %v48, %v388
  %v390 = vpop.f32.mrf.mxu0
  %391 = vdwg.mxu0
  %v392 = vpack.c.bf16 %v376, %v376
  %393 = vmatpush.bf16.msra.mxu0 %v167
  %394 = vmatpush.bf16.msra.mxu0 %v166
  %395 = vmatpush.bf16.msra.mxu0 %v165
  %396 = vmatpush.bf16.msra.mxu0 %v164
  %397 = vmatpush.bf16.msra.mxu0 %v163
  %398 = vmatpush.bf16.msra.mxu0 %v162
  %399 = vmatpush.bf16.msra.mxu0 %v161
  %400 = vmatpush.bf16.msra.mxu0 %v160
  %401 = vmatmul.bf16.gmra.mxu0 %v392
  %v402 = vpop.f32.mrf.mxu0
  %v403 = vadd.f32 0.0, %v402
  %v404 = vpop.f32.mrf.mxu0
  %405 = vdwg.mxu0
  %v406 = vadd.f32 %v389, %v403
  %v407 = vtanh.pop %v406
  %408 = vst [vmem:[#allocation2] sm:$0xff] %v407
  // Predicated region
  $region30: #{rnn_forward.1} parent=0 // pred_check
    %p409 = pneg %p23
  $region31: #{rnn_forward.1} parent=0 // pred_check_branch
    %411 = sbr.rel (%p409) target = $region33
  $region32: #{rnn_forward.1} parent=0 // pred_region
    %v412 = vpack.c.bf16 %v407, %v407
    %v413 = vld [vmem:[%s4] sm:$0xf]
    %v414 = vld [vmem:[%s4 + $0x4] sm:$0xf]
    %v415 = vld [vmem:[%s4 + $0x8] sm:$0xf]
    %v416 = vld [vmem:[%s4 + $0xc] sm:$0xf]
    %v417 = vld [vmem:[%s4 + $0x10] sm:$0xf]
    %v418 = vld [vmem:[%s4 + $0x14] sm:$0xf]
    %v419 = vld [vmem:[%s4 + $0x18] sm:$0xf]
    %v420 = vld [vmem:[%s4 + $0x1c] sm:$0xf]
    %v421 = vld [vmem:[%s4 + $0x20] sm:$0xf]
    %v422 = vld [vmem:[%s4 + $0x24] sm:$0xf]
    %v423 = vld [vmem:[%s4 + $0x28] sm:$0xf]
    %v424 = vld [vmem:[%s4 + $0x2c] sm:$0xf]
    %v425 = vld [vmem:[%s4 + $0x30] sm:$0xf]
    %v426 = vld [vmem:[%s4 + $0x34] sm:$0xf]
    %v427 = vld [vmem:[%s4 + $0x38] sm:$0xf]
    %v428 = vld [vmem:[%s4 + $0x3c] sm:$0xf]
    %v429 = vld [vmem:[%s5] sm:$0x1]
    %v431 = vperm.slane %v429, 0
    %v449 = vunpack.c.l.b16 %v413
    %v450 = vunpack.c.l.b16 %v414
    %v451 = vunpack.c.l.b16 %v415
    %v452 = vunpack.c.l.b16 %v416
    %v453 = vunpack.c.l.b16 %v417
    %v454 = vunpack.c.l.b16 %v418
    %v455 = vunpack.c.l.b16 %v419
    %v456 = vunpack.c.l.b16 %v420
    %v457 = vunpack.c.l.b16 %v421
    %v458 = vunpack.c.l.b16 %v422
    %v459 = vunpack.c.l.b16 %v423
    %v460 = vunpack.c.l.b16 %v424
    %v461 = vunpack.c.l.b16 %v425
    %v462 = vunpack.c.l.b16 %v426
    %v463 = vunpack.c.l.b16 %v427
    %v464 = vunpack.c.l.b16 %v428
    %v465 = vpack.c.b16 %v450, %v449
    %v466 = vpack.c.b16 %v452, %v451
    %v467 = vpack.c.b16 %v454, %v453
    %v468 = vpack.c.b16 %v456, %v455
    %v469 = vpack.c.b16 %v458, %v457
    %v470 = vpack.c.b16 %v460, %v459
    %v471 = vpack.c.b16 %v462, %v461
    %v472 = vpack.c.b16 %v464, %v463
    %481 = vmatpush.bf16.msra.mxu0 %v472
    %482 = vmatpush.bf16.msra.mxu0 %v471
    %483 = vmatpush.bf16.msra.mxu0 %v470
    %484 = vmatpush.bf16.msra.mxu0 %v469
    %485 = vmatpush.bf16.msra.mxu0 %v468
    %486 = vmatpush.bf16.msra.mxu0 %v467
    %487 = vmatpush.bf16.msra.mxu0 %v466
    %488 = vmatpush.bf16.msra.mxu0 %v465
    %489 = vmatmul.bf16.gmra.mxu0 %v412
    %v490 = vpop.f32.mrf.mxu0
    %v491 = vadd.f32 %v431, %v490
    %v492 = vpop.f32.mrf.mxu0
    %493 = vdwg.mxu0
    %494 = vst [vmem:[%s6] sm:$0xff] %v491
  $region33: #{rnn_forward.1} parent=0 // pred_fallthru
    _
  // Predicated region
  $region34: #{rnn_forward.1} parent=0 // pred_check
    _
  $region35: #{rnn_forward.1} parent=0 // pred_check_branch
    %496 = sbr.rel (0) target = $region37
  $region36: #{rnn_forward.1} parent=0 // pred_region
    _
  $region37: #{rnn_forward.1} parent=0 // pred_fallthru
    _
  // Predicated region
  $region38: #{rnn_forward.1} parent=0 // pred_check
    _
  $region39: #{rnn_forward.1} parent=0 // pred_check_branch
    %498 = sbr.rel (0) target = $region41
  $region40: #{rnn_forward.1} parent=0 // pred_region
    _
  $region41: #{rnn_forward.1} parent=0 // pred_fallthru
    _

</llo_original>
